<compile_context>
chip_gen: v7x
topology: tpu7x:2x2x1
jax: 0.10.0
libtpu: 0.0.40
codegen_flags: <defaults>
</compile_context>

<pallas_src>
import functools
import math

import jax
import jax.numpy as jnp
import numpy as np
from jax.experimental import pallas as pl
from jax.experimental.pallas import tpu as pltpu

_LANES = 128
_DEFAULT_TILE_ROWS = 4096   # 4096 x 128 f32 = 2 MiB per streamed input block


def _round_up(n, m):
    return ((n + m - 1) // m) * m


def _to_slab(x, pad_value):
    """Flatten to (rows, 128) in native dtype.

    For contiguous row-major inputs whose element count is a multiple of 128
    (the common case for NCHW image tensors) this is a zero-copy reshape; only
    a ragged tail (< 128 elements) triggers a tiny pad.
    """
    flat = jnp.ravel(x)
    n = flat.shape[0]
    rows = _round_up(n, _LANES) // _LANES
    padded = rows * _LANES
    if padded != n:
        flat = jnp.pad(flat, (0, padded - n), constant_values=pad_value)
    return flat.reshape(rows, _LANES)


def _rd_loss_kernel(xhat_ref, tgt_ref, y_ref, z_ref, out_ref, acc_ref, *,
                    tile_rows, rows_x, needs_mask, inv_denom, mse_scale,
                    lmbda):
    i = pl.program_id(0)
    nsteps = pl.num_programs(0)

    @pl.when(i == 0)
    def _init():
        acc_ref[...] = jnp.zeros_like(acc_ref)

    # ---- hot loop: streamed squared-error partial sums (pure VPU) ----
    x = xhat_ref[...].astype(jnp.float32)
    t = tgt_ref[...].astype(jnp.float32)
    d = x - t
    d2 = d * d

    def _collapse(v):
        # (tile_rows, 128) -> (8, 128): vreg-wise adds only (sublane split,
        # no cross-lane / XLU traffic), then one (8,128) accumulator update.
        return jnp.sum(v.reshape(tile_rows // 8, 8, _LANES), axis=0)

    if needs_mask:
        # Last block reads past rows_x -> garbage rows; mask them, but only
        # on the final step. All steady-state steps take the bare path.
        is_last = i == nsteps - 1

        @pl.when(jnp.logical_not(is_last))
        def _acc_full():
            acc_ref[...] += _collapse(d2)

        @pl.when(is_last)
        def _acc_masked():
            row_ids = jax.lax.broadcasted_iota(
                jnp.int32, (tile_rows, _LANES), 0)
            valid = (row_ids + i * tile_rows) < rows_x
            acc_ref[...] += _collapse(jnp.where(valid, d2, 0.0))
    else:
        acc_ref[...] += _collapse(d2)

    # ---- finalize: single cross-lane collapse + scalar epilogue ----
    @pl.when(i == nsteps - 1)
    def _finalize():
        sse = jnp.sum(acc_ref[...])
        # y/z slabs are small, VMEM-resident across the grid (constant index
        # map) and padded with 1.0 (log(1) == 0), so one full reduce is exact.
        y_logsum = jnp.sum(jnp.log(y_ref[...].astype(jnp.float32)))
        z_logsum = jnp.sum(jnp.log(z_ref[...].astype(jnp.float32)))
        y_bpp = y_logsum * inv_denom
        z_bpp = z_logsum * inv_denom
        bpp = y_bpp + z_bpp
        mse = sse * mse_scale
        out_ref[0] = bpp
        out_ref[1] = y_bpp
        out_ref[2] = z_bpp
        out_ref[3] = mse
        out_ref[4] = lmbda * mse + bpp


def rate_distortion_loss(output, target, lmbda):
    """JAX/Pallas equivalent of RateDistortionLoss.forward.

    output: {'x_hat': (N,C,H,W), 'likelihoods': {'y': array, 'z': array}}
    target: (N,C,H,W)
    Returns dict of f32 scalars: bpp, y_bpp, z_bpp, mse, loss.
    """
    x_hat = output['x_hat']
    y_lik = output['likelihoods']['y']
    z_lik = output['likelihoods']['z']

    N, _, H, W = target.shape
    num_pixels = float(N * H * W)
    num_elems = float(np.prod(x_hat.shape))

    # Native-dtype, (mostly) zero-copy lane-dense views.
    xhat2d = _to_slab(x_hat, 0)    # pad 0: diff on pad = 0
    tgt2d = _to_slab(target, 0)
    y2d = _to_slab(y_lik, 1)       # pad 1: log(1) = 0
    z2d = _to_slab(z_lik, 1)

    rows_x = xhat2d.shape[0]
    tile_rows = min(_DEFAULT_TILE_ROWS, _round_up(rows_x, 8))
    nb = _round_up(rows_x, tile_rows) // tile_rows
    needs_mask = (rows_x % tile_rows) != 0

    kernel = functools.partial(
        _rd_loss_kernel,
        tile_rows=tile_rows,
        rows_x=rows_x,
        needs_mask=needs_mask,
        inv_denom=1.0 / (-math.log(2.0) * num_pixels),
        mse_scale=(255.0 ** 2) / num_elems,
        lmbda=float(lmbda),
    )

    res = pl.pallas_call(
        kernel,
        out_shape=jax.ShapeDtypeStruct((5,), jnp.float32),
        grid_spec=pltpu.PrefetchScalarGridSpec(
            num_scalar_prefetch=0,
            grid=(nb,),
            in_specs=[
                pl.BlockSpec((tile_rows, _LANES), lambda i: (i, 0)),   # x_hat
                pl.BlockSpec((tile_rows, _LANES), lambda i: (i, 0)),   # target
                pl.BlockSpec(y2d.shape, lambda i: (0, 0)),             # lik_y (resident)
                pl.BlockSpec(z2d.shape, lambda i: (0, 0)),             # lik_z (resident)
            ],
            out_specs=pl.BlockSpec(memory_space=pltpu.MemorySpace.SMEM),
            scratch_shapes=[pltpu.VMEM((8, _LANES), jnp.float32)],
        ),
        compiler_params=pltpu.CompilerParams(
            dimension_semantics=("arbitrary",),
            vmem_limit_bytes=32 * 1024 * 1024,
        ),
    )(xhat2d, tgt2d, y2d, z2d)

    return {
        'bpp': res[0],
        'y_bpp': res[1],
        'z_bpp': res[2],
        'mse': res[3],
        'loss': res[4],
    }


def _reference(output, target, lmbda):
    """Pure-JAX reference mirroring the PyTorch math."""
    N, _, H, W = target.shape
    num_pixels = N * H * W
    y = output['likelihoods']['y']
    z = output['likelihoods']['z']
    y_bpp = jnp.sum(jnp.log(y)) / (-math.log(2.0) * num_pixels)
    z_bpp = jnp.sum(jnp.log(z)) / (-math.log(2.0) * num_pixels)
    bpp = y_bpp + z_bpp
    mse = jnp.mean((output['x_hat'] - target) ** 2) * 255.0 ** 2
    return {'bpp': bpp, 'y_bpp': y_bpp, 'z_bpp': z_bpp, 'mse': mse,
            'loss': lmbda * mse + bpp}


if __name__ == "__main__":
    key = jax.random.PRNGKey(0)
    k1, k2, k3, k4 = jax.random.split(key, 4)

    # Small, forward-consistent shapes: image NCHW, latent likelihoods at
    # reduced spatial resolution (as in a compression model).
    N, C, H, W = 2, 3, 16, 16
    target = jax.random.uniform(k1, (N, C, H, W), dtype=jnp.float32)
    x_hat = jnp.clip(
        target + 0.05 * jax.random.normal(k2, (N, C, H, W), dtype=jnp.float32),
        0.0, 1.0)
    # Likelihoods must be in (0, 1].
    y_lik = jax.random.uniform(k3, (N, 8, H // 4, W // 4), dtype=jnp.float32,
                               minval=1e-3, maxval=1.0)
    z_lik = jax.random.uniform(k4, (N, 8, H // 8, W // 8), dtype=jnp.float32,
                               minval=1e-3, maxval=1.0)

    output = {'x_hat': x_hat, 'likelihoods': {'y': y_lik, 'z': z_lik}}
    lmbda = 0.01

    out = rate_distortion_loss(output, target, lmbda)
    jax.block_until_ready(out)

    ref = _reference(output, target, lmbda)
    for k in ('bpp', 'y_bpp', 'z_bpp', 'mse', 'loss'):
        np.testing.assert_allclose(np.asarray(out[k]), np.asarray(ref[k]),
                                   rtol=1e-4, atol=1e-4)

    print("KERNEL_OK")
</pallas_src>

<mosaic_0001>
module attributes {stable_mosaic.version = 11 : i64} {
  func.func @_rd_loss_kernel(%arg0: i32, %arg1: memref<16x128xf32, #tpu.memory_space<vmem>>, %arg2: memref<16x128xf32, #tpu.memory_space<vmem>>, %arg3: memref<2x128xf32, #tpu.memory_space<vmem>>, %arg4: memref<1x128xf32, #tpu.memory_space<vmem>>, %arg5: memref<5xf32, #tpu.memory_space<smem>>, %arg6: memref<8x128xf32, #tpu.memory_space<vmem>>) attributes {dimension_semantics = [#tpu.dimension_semantics<arbitrary>], iteration_bounds = array<i64: 1>, scalar_prefetch = 0 : i64, scratch_operands = 1 : i64, tpu.core_type = #tpu.core_type<tc>, window_params = [{transform_indices = @transform_0, window_bounds = array<i64: 16, 128>}, {transform_indices = @transform_1, window_bounds = array<i64: 16, 128>}, {pipeline_mode = #tpu.pipeline_mode<synchronous>, transform_indices = @transform_2, window_bounds = array<i64: 2, 128>}, {pipeline_mode = #tpu.pipeline_mode<synchronous>, transform_indices = @transform_3, window_bounds = array<i64: 1, 128>}, {transform_indices = @transform_4, window_bounds = array<i64: 5>}]} {
    %c0_i32 = arith.constant 0 : i32
    %0 = arith.cmpi eq, %arg0, %c0_i32 : i32
    %1 = arith.extui %0 : i1 to i32
    %c0_i32_0 = arith.constant 0 : i32
    %2 = arith.cmpi ne, %1, %c0_i32_0 : i32
    scf.if %2 {
      %cst = arith.constant 0.000000e+00 : f32
      %16 = vector.broadcast %cst : f32 to vector<8x128xf32>
      %c0_9 = arith.constant 0 : index
      %c0_10 = arith.constant 0 : index
      %17 = vector.load %arg6[%c0_9, %c0_10] : memref<8x128xf32, #tpu.memory_space<vmem>>, vector<8x128xf32>
      tpu.vector_store %arg6[%c0_9, %c0_10], %16 {strides = array<i32>} : memref<8x128xf32, #tpu.memory_space<vmem>>, vector<8x128xf32>,
    } else {
    }
    %c0 = arith.constant 0 : index
    %c0_1 = arith.constant 0 : index
    %3 = vector.load %arg1[%c0, %c0_1] : memref<16x128xf32, #tpu.memory_space<vmem>>, vector<16x128xf32>
    %c0_2 = arith.constant 0 : index
    %c0_3 = arith.constant 0 : index
    %4 = vector.load %arg2[%c0_2, %c0_3] : memref<16x128xf32, #tpu.memory_space<vmem>>, vector<16x128xf32>
    %5 = arith.subf %3, %4 : vector<16x128xf32>
    %6 = arith.mulf %5, %5 : vector<16x128xf32>
    %c0_i32_4 = arith.constant 0 : i32
    %7 = arith.cmpi eq, %arg0, %c0_i32_4 : i32
    %true = arith.constant true
    %8 = arith.xori %7, %true : i1
    %9 = arith.extui %8 : i1 to i32
    %c0_i32_5 = arith.constant 0 : i32
    %10 = arith.cmpi ne, %9, %c0_i32_5 : i32
    scf.if %10 {
      %c0_9 = arith.constant 0 : index
      %c0_10 = arith.constant 0 : index
      %16 = vector.load %arg6[%c0_9, %c0_10] : memref<8x128xf32, #tpu.memory_space<vmem>>, vector<8x128xf32>
      %17 = vector.shape_cast %6 : vector<16x128xf32> to vector<2x8x128xf32>
      %cst = arith.constant dense<0.000000e+00> : vector<8x128xf32>
      %18 = vector.multi_reduction <add>, %17, %cst [0] : vector<2x8x128xf32> to vector<8x128xf32>
      %19 = arith.addf %16, %18 : vector<8x128xf32>
      %c0_11 = arith.constant 0 : index
      %c0_12 = arith.constant 0 : index
      %20 = vector.load %arg6[%c0_11, %c0_12] : memref<8x128xf32, #tpu.memory_space<vmem>>, vector<8x128xf32>
      tpu.vector_store %arg6[%c0_11, %c0_12], %19 {strides = array<i32>} : memref<8x128xf32, #tpu.memory_space<vmem>>, vector<8x128xf32>,
    } else {
    }
    %11 = arith.extui %7 : i1 to i32
    %c0_i32_6 = arith.constant 0 : i32
    %12 = arith.cmpi ne, %11, %c0_i32_6 : i32
    scf.if %12 {
      %16 = tpu.iota {dimensions = array<i32: 0>} : vector<16x128xi32>
      %c16_i32 = arith.constant 16 : i32
      %17 = arith.muli %arg0, %c16_i32 : i32
      %18 = vector.broadcast %17 : i32 to vector<16x128xi32>
      %19 = arith.addi %16, %18 : vector<16x128xi32>
      %c12_i32 = arith.constant 12 : i32
      %20 = vector.broadcast %c12_i32 : i32 to vector<16x128xi32>
      %21 = arith.cmpi slt, %19, %20 : vector<16x128xi32>
      %c0_9 = arith.constant 0 : index
      %c0_10 = arith.constant 0 : index
      %22 = vector.load %arg6[%c0_9, %c0_10] : memref<8x128xf32, #tpu.memory_space<vmem>>, vector<8x128xf32>
      %cst = arith.constant 0.000000e+00 : f32
      %23 = vector.broadcast %cst : f32 to vector<16x128xf32>
      %24 = arith.select %21, %6, %23 : vector<16x128xi1>, vector<16x128xf32>
      %25 = vector.shape_cast %24 : vector<16x128xf32> to vector<2x8x128xf32>
      %cst_11 = arith.constant dense<0.000000e+00> : vector<8x128xf32>
      %26 = vector.multi_reduction <add>, %25, %cst_11 [0] : vector<2x8x128xf32> to vector<8x128xf32>
      %27 = arith.addf %22, %26 : vector<8x128xf32>
      %c0_12 = arith.constant 0 : index
      %c0_13 = arith.constant 0 : index
      %28 = vector.load %arg6[%c0_12, %c0_13] : memref<8x128xf32, #tpu.memory_space<vmem>>, vector<8x128xf32>
      tpu.vector_store %arg6[%c0_12, %c0_13], %27 {strides = array<i32>} : memref<8x128xf32, #tpu.memory_space<vmem>>, vector<8x128xf32>,
    } else {
    }
    %c0_i32_7 = arith.constant 0 : i32
    %13 = arith.cmpi eq, %arg0, %c0_i32_7 : i32
    %14 = arith.extui %13 : i1 to i32
    %c0_i32_8 = arith.constant 0 : i32
    %15 = arith.cmpi ne, %14, %c0_i32_8 : i32
    scf.if %15 {
      %c0_9 = arith.constant 0 : index
      %c0_10 = arith.constant 0 : index
      %16 = vector.load %arg6[%c0_9, %c0_10] : memref<8x128xf32, #tpu.memory_space<vmem>>, vector<8x128xf32>
      %17 = vector.shape_cast %16 : vector<8x128xf32> to vector<1x8x128xf32>
      %cst = arith.constant dense<0.000000e+00> : vector<1xf32>
      %18 = vector.multi_reduction <add>, %17, %cst [1, 2] : vector<1x8x128xf32> to vector<1xf32>
      %19 = vector.shape_cast %18 : vector<1xf32> to vector<1x1x1xf32>
      %20 = vector.extract %19[0, 0, 0] : f32 from vector<1x1x1xf32>
      %c0_11 = arith.constant 0 : index
      %c0_12 = arith.constant 0 : index
      %21 = vector.load %arg3[%c0_11, %c0_12] : memref<2x128xf32, #tpu.memory_space<vmem>>, vector<2x128xf32>
      %22 = math.log %21 : vector<2x128xf32>
      %23 = vector.shape_cast %22 : vector<2x128xf32> to vector<1x2x128xf32>
      %cst_13 = arith.constant dense<0.000000e+00> : vector<1xf32>
      %24 = vector.multi_reduction <add>, %23, %cst_13 [1, 2] : vector<1x2x128xf32> to vector<1xf32>
      %25 = vector.shape_cast %24 : vector<1xf32> to vector<1x1x1xf32>
      %26 = vector.extract %25[0, 0, 0] : f32 from vector<1x1x1xf32>
      %c0_14 = arith.constant 0 : index
      %c0_15 = arith.constant 0 : index
      %27 = vector.load %arg4[%c0_14, %c0_15] : memref<1x128xf32, #tpu.memory_space<vmem>>, vector<1x128xf32>
      %28 = math.log %27 : vector<1x128xf32>
      %29 = vector.shape_cast %28 : vector<1x128xf32> to vector<1x1x128xf32>
      %cst_16 = arith.constant dense<0.000000e+00> : vector<1xf32>
      %30 = vector.multi_reduction <add>, %29, %cst_16 [1, 2] : vector<1x1x128xf32> to vector<1xf32>
      %31 = vector.shape_cast %30 : vector<1xf32> to vector<1x1x1xf32>
      %32 = vector.extract %31[0, 0, 0] : f32 from vector<1x1x1xf32>
      %cst_17 = arith.constant -0.00281776371 : f32
      %33 = arith.mulf %26, %cst_17 : f32
      %cst_18 = arith.constant -0.00281776371 : f32
      %34 = arith.mulf %32, %cst_18 : f32
      %35 = arith.addf %33, %34 : f32
      %cst_19 = arith.constant 42.3339844 : f32
      %36 = arith.mulf %20, %cst_19 : f32
      %c0_20 = arith.constant 0 : index
      %37 = memref.load %arg5[%c0_20] : memref<5xf32, #tpu.memory_space<smem>>
      memref.store %35, %arg5[%c0_20] : memref<5xf32, #tpu.memory_space<smem>>
      %c1 = arith.constant 1 : index
      %38 = memref.load %arg5[%c1] : memref<5xf32, #tpu.memory_space<smem>>
      memref.store %33, %arg5[%c1] : memref<5xf32, #tpu.memory_space<smem>>
      %c2 = arith.constant 2 : index
      %39 = memref.load %arg5[%c2] : memref<5xf32, #tpu.memory_space<smem>>
      memref.store %34, %arg5[%c2] : memref<5xf32, #tpu.memory_space<smem>>
      %c3 = arith.constant 3 : index
      %40 = memref.load %arg5[%c3] : memref<5xf32, #tpu.memory_space<smem>>
      memref.store %36, %arg5[%c3] : memref<5xf32, #tpu.memory_space<smem>>
      %cst_21 = arith.constant 0.00999999977 : f32
      %41 = arith.mulf %cst_21, %36 : f32
      %42 = arith.addf %41, %35 : f32
      %c4 = arith.constant 4 : index
      %43 = memref.load %arg5[%c4] : memref<5xf32, #tpu.memory_space<smem>>
      memref.store %42, %arg5[%c4] : memref<5xf32, #tpu.memory_space<smem>>
    } else {
    }
    return
  }
  func.func @transform_0(%arg0: i32) -> (i32, i32) {
    %c0_i32 = arith.constant 0 : i32
    %c0_i32_0 = arith.constant 0 : i32
    return %arg0, %c0_i32 : i32, i32
  }
  func.func @transform_1(%arg0: i32) -> (i32, i32) {
    %c0_i32 = arith.constant 0 : i32
    %c0_i32_0 = arith.constant 0 : i32
    return %arg0, %c0_i32 : i32, i32
  }
  func.func @transform_2(%arg0: i32) -> (i32, i32) {
    %c0_i32 = arith.constant 0 : i32
    %c0_i32_0 = arith.constant 0 : i32
    %c0_i32_1 = arith.constant 0 : i32
    return %c0_i32, %c0_i32_0 : i32, i32
  }
  func.func @transform_3(%arg0: i32) -> (i32, i32) {
    %c0_i32 = arith.constant 0 : i32
    %c0_i32_0 = arith.constant 0 : i32
    %c0_i32_1 = arith.constant 0 : i32
    return %c0_i32, %c0_i32_0 : i32, i32
  }
  func.func @transform_4(%arg0: i32) -> i32 {
    %c0_i32 = arith.constant 0 : i32
    %c0_i32_0 = arith.constant 0 : i32
    return %c0_i32 : i32
  }
}

</mosaic_0001>

<llo_original>
// kernel: tpu_custom_call.1
$region0: #{tpu_custom_call.1}
  #allocation0 [shape = 'u32[]', space=smem, size = 0x4, offset = 0x4, fixed_abs, tag = 'smem constant byte address 0x4 - core index']
  #allocation1 [shape = 'u32[144,128]{1,0:T(1,128)}', space=vmem, size = 0x12000, scoped, tag = 'internal scratch']
  #allocation2 [shape = 'f32[8,128]{1,0:T(8,128)}', space=vmem, size = 0x1000, scoped, tag = 'scratch operand']
  %s0 = inlined_call_operand.hbm [shape: f32[12,128], index: 0, kind: input, shape index: {}]
  %s1 = inlined_call_operand.hbm [shape: f32[12,128], index: 1, kind: input, shape index: {}]
  %s2 = inlined_call_operand.vmem [shape: f32[2,128], index: 2, kind: input, shape index: {}]
  %s3 = inlined_call_operand.vmem [shape: f32[1,128], index: 3, kind: input, shape index: {}]
  %s4 = inlined_call_operand.hbm [shape: f32[5], index: 4, kind: output, shape index: {}]
  %s5 = sld [smem:[#allocation0]]
  $region46: #{tpu_custom_call.1} parent=0
    _
  %s7 = ssub.s32 1, %s5
  %s8 = scalar_select 0, %s7, %s5
  $region1: #{tpu_custom_call.1} parent=0
    #allocation3 [shape = 'u8[8192]{0}', space=vmem, size = 0x2000, scoped, tag = 'input window, operand 0, single buffered']
    #allocation4 [shape = 's32[1]{0}', space=sflag, size = 0x4, scoped, tag = 'scoped memory for tpu_custom_call.1']
    #allocation5 [shape = 's32[1]{0}', space=sflag, size = 0x4, scoped, tag = 'scoped memory for tpu_custom_call.1']
    #allocation6 [shape = 'u8[8192]{0}', space=vmem, size = 0x2000, scoped, tag = 'input window, operand 1, single buffered']
    #allocation7 [shape = 's32[1]{0}', space=sflag, size = 0x4, scoped, tag = 'scoped memory for tpu_custom_call.1']
    #allocation8 [shape = 'u8[512]{0}', space=smem, size = 0x200, scoped, tag = 'output window, operand 0, single buffered']
    %9 = vsyncpa [#allocation4], 0
    %10 = vsyncpa [#allocation7], 0
    %11 = vsyncpa [#allocation5], 0
    // Predicated region
    $region2: #{tpu_custom_call.1} parent=1 // pred_check
      _
    $region3: #{tpu_custom_call.1} parent=1 // pred_check_branch
      %13 = sbr.rel (0) target = $region5
    $region4: #{tpu_custom_call.1} parent=1 // pred_region
      %s15 = ssub.s32 256, 256
      %16 = vsyncadd [#allocation4], %s15
      %s17 = sshll.u32 [#allocation3], 4
      %s18 = int_to_ptr.vmem [resolvable:$true] %s17
      %23 = dma.hbm_to_vmem [thread:$0]  %s0, 256, %s18, [#allocation4], 128, 128, 8
    $region5: #{tpu_custom_call.1} parent=1 // pred_fallthru
      _
    // Predicated region
    $region6: #{tpu_custom_call.1} parent=1 // pred_check
      _
    $region7: #{tpu_custom_call.1} parent=1 // pred_check_branch
      %25 = sbr.rel (0) target = $region9
    $region8: #{tpu_custom_call.1} parent=1 // pred_region
      %s27 = ssub.s32 256, 256
      %28 = vsyncadd [#allocation7], %s27
      %s29 = sshll.u32 [#allocation6], 4
      %s30 = int_to_ptr.vmem [resolvable:$true] %s29
      %35 = dma.hbm_to_vmem [thread:$0]  %s1, 256, %s30, [#allocation7], 128, 128, 8
    $region9: #{tpu_custom_call.1} parent=1 // pred_fallthru
      _
    // Predicated region
    $region10: #{tpu_custom_call.1} parent=1 // pred_check
      _
    $region11: #{tpu_custom_call.1} parent=1 // pred_check_branch
      %37 = sbr.rel (0) target = $region13
    $region12: #{tpu_custom_call.1} parent=1 // pred_region
      _
    $region13: #{tpu_custom_call.1} parent=1 // pred_fallthru
      _
    // Predicated region
    $region14: #{tpu_custom_call.1} parent=1 // pred_check
      _
    $region15: #{tpu_custom_call.1} parent=1 // pred_check_branch
      %39 = sbr.rel (0) target = $region17
    $region16: #{tpu_custom_call.1} parent=1 // pred_region
      _
    $region17: #{tpu_custom_call.1} parent=1 // pred_fallthru
      _
    // Predicated region
    $region18: #{tpu_custom_call.1} parent=1 // pred_check
      _
    $region19: #{tpu_custom_call.1} parent=1 // pred_check_branch
      %41 = sbr.rel (0) target = $region21
    $region20: #{tpu_custom_call.1} parent=1 // pred_region
      %42 = dma.done [#allocation4], 256
    $region21: #{tpu_custom_call.1} parent=1 // pred_fallthru
      _
    // Predicated region
    $region22: #{tpu_custom_call.1} parent=1 // pred_check
      _
    $region23: #{tpu_custom_call.1} parent=1 // pred_check_branch
      %44 = sbr.rel (0) target = $region25
    $region24: #{tpu_custom_call.1} parent=1 // pred_region
      %45 = dma.done [#allocation7], 256
    $region25: #{tpu_custom_call.1} parent=1 // pred_fallthru
      _
    %p46 = scmp.eq.s32.totalorder 0, 0
    // Predicated region
    $region26: #{tpu_custom_call.1} parent=1 // pred_check
      %p47 = pneg %p46
    $region27: #{tpu_custom_call.1} parent=1 // pred_check_branch
      %49 = sbr.rel (%p47) target = $region29
    $region28: #{tpu_custom_call.1} parent=1 // pred_region
      %50 = vst [vmem:[#allocation2] sm:$0xff] 0.0
    $region29: #{tpu_custom_call.1} parent=1 // pred_fallthru
      _
    %v51 = vld [vmem:[#allocation3] sm:$0xff]
    %v52 = vld [vmem:[#allocation3 + $0x8] sm:$0xff]
    %v53 = vld [vmem:[#allocation6] sm:$0xff]
    %v54 = vld [vmem:[#allocation6 + $0x8] sm:$0xff]
    %v55 = vsub.f32 %v51, %v53
    %v56 = vsub.f32 %v52, %v54
    %v57 = vmul.f32 %v55, %v55
    %v58 = vmul.f32 %v56, %v56
    %p59 = scmp.ne.s32.totalorder 0, 0
    // Predicated region
    $region30: #{tpu_custom_call.1} parent=1 // pred_check
      %p60 = pneg %p59
    $region31: #{tpu_custom_call.1} parent=1 // pred_check_branch
      %62 = sbr.rel (%p60) target = $region33
    $region32: #{tpu_custom_call.1} parent=1 // pred_region
      %v63 = vld [vmem:[#allocation2] sm:$0xff]
      %v64 = vadd.f32 %v57, %v58
      %v65 = vadd.f32 %v63, %v64
      %66 = vst [vmem:[#allocation2] sm:$0xff] %v65
    $region33: #{tpu_custom_call.1} parent=1 // pred_fallthru
      _
    // Predicated region
    $region34: #{tpu_custom_call.1} parent=1 // pred_check
      %p67 = pneg %p46
    $region35: #{tpu_custom_call.1} parent=1 // pred_check_branch
      %69 = sbr.rel (%p67) target = $region37
    $region36: #{tpu_custom_call.1} parent=1 // pred_region
      %v70 = vlaneseq
      %v71 = vshrl.u32 %v70, 7
      %v72 = vadd.s32 %v71, 8
      %s73 = smul.u32 0, 16
      %v74 = vstv %s73
      %v75 = vadd.s32 %v71, %v74
      %v76 = vadd.s32 %v72, %v74
      %vm77 = vcmp.lt.s32.totalorder %v75, 12
      %vm78 = vcmp.lt.s32.totalorder %v76, 12
      %v79 = vld [vmem:[#allocation2] sm:$0xff]
      %v80 = vsel %vm77, %v57, 0.0
      %v81 = vsel %vm78, %v58, 0.0
      %v82 = vadd.f32 %v80, %v81
      %v83 = vadd.f32 %v79, %v82
      %84 = vst [vmem:[#allocation2] sm:$0xff] %v83
      %v85 = vld [vmem:[#allocation2] sm:$0xff]
      %86 = vadd.xlane.f32.xlu0 %v85
      %v87 = vpop.xlane.xlu0 %86
      %v88 = vrot.slane %v87, 4
      %v89 = vadd.f32 %v87, %v88
      %v90 = vrot.slane %v89, 2
      %v91 = vadd.f32 %v89, %v90
      %v92 = vrot.slane %v91, 1
      %v93 = vadd.f32 %v91, %v92
      %s94 = vtos %v93
      %v95 = vld [vmem:[%s2] sm:$0x3]
      %v96 = vlog2.pop %v95
      %v97 = vmul.f32 %v96, 0.6931472
      %vm98 = vcmask 1041408
      %v99 = vsel %vm98, %v97, 0.0
      %100 = vadd.xlane.f32.xlu0 %v99
      %v101 = vpop.xlane.xlu0 %100
      %v102 = vrot.slane %v101, 4
      %v103 = vadd.f32 %v101, %v102
      %v104 = vrot.slane %v103, 2
      %v105 = vadd.f32 %v103, %v104
      %v106 = vrot.slane %v105, 1
      %v107 = vadd.f32 %v105, %v106
      %s108 = vtos %v107
      %v109 = vld [vmem:[%s3] sm:$0x1]
      %v110 = vlog2.pop %v109
      %v111 = vmul.f32 %v110, 0.6931472
      %vm112 = vcmask 1040384
      %v113 = vsel %vm112, %v111, 0.0
      %114 = vadd.xlane.f32.xlu0 %v113
      %v115 = vpop.xlane.xlu0 %114
      %v116 = vrot.slane %v115, 4
      %v117 = vadd.f32 %v115, %v116
      %v118 = vrot.slane %v117, 2
      %v119 = vadd.f32 %v117, %v118
      %v120 = vrot.slane %v119, 1
      %v121 = vadd.f32 %v119, %v120
      %s122 = vtos %v121
      %s123 = smul.f32 %s108, -0.0028177637
      %s124 = smul.f32 %s122, -0.0028177637
      %s125 = sadd.f32 %s123, %s124
      %s126 = smul.f32 %s94, 42.333984
      %s127 = scalar_lea.smem [#allocation8], 0
      %128 = sst [smem:[%s127]] %s125
      %s129 = scalar_lea.smem [#allocation8], 1
      %130 = sst [smem:[%s129]] %s123
      %s131 = scalar_lea.smem [#allocation8], 2
      %132 = sst [smem:[%s131]] %s124
      %s133 = scalar_lea.smem [#allocation8], 3
      %134 = sst [smem:[%s133]] %s126
      %s135 = smul.f32 %s126, 0.01
      %s136 = sadd.f32 %s135, %s125
      %s137 = scalar_lea.smem [#allocation8], 4
      %138 = sst [smem:[%s137]] %s136
    $region37: #{tpu_custom_call.1} parent=1 // pred_fallthru
      _
    // Predicated region
    $region38: #{tpu_custom_call.1} parent=1 // pred_check
      _
    $region39: #{tpu_custom_call.1} parent=1 // pred_check_branch
      %140 = sbr.rel (0) target = $region41
    $region40: #{tpu_custom_call.1} parent=1 // pred_region
      %s142 = ssub.s32 16, 16
      %143 = vsyncadd [#allocation5], %s142
      %146 = dma.smem_to_hbm [#allocation8], 16, %s4, [#allocation5]
    $region41: #{tpu_custom_call.1} parent=1 // pred_fallthru
      _
    // Predicated region
    $region42: #{tpu_custom_call.1} parent=1 // pred_check
      _
    $region43: #{tpu_custom_call.1} parent=1 // pred_check_branch
      %148 = sbr.rel (0) target = $region45
    $region44: #{tpu_custom_call.1} parent=1 // pred_region
      %149 = dma.done [#allocation5], 16
    $region45: #{tpu_custom_call.1} parent=1 // pred_fallthru
      _
    %150 = sfence
    %151 = vsyncpa [#allocation4], 1
    %152 = vsyncpa [#allocation7], 1
    %153 = vsyncpa [#allocation5], 1

</llo_original>
